<compile_context>
chip_gen: v6e
topology: v6e:2x2x1
jax: 0.10.0
libtpu: 0.0.40
codegen_flags: <defaults>
</compile_context>

<pallas_src>
import functools

import jax
import jax.numpy as jnp
from jax.experimental import pallas as pl
from jax.experimental.pallas import tpu as pltpu


def _round_up(n, m):
    return ((n + m - 1) // m) * m


def _sub_kernel(x_ref, w1_ref, w2_ref, b1_ref, b2_ref, o_ref, *, compute_dtype):
    """One batch tile: out = x @ (W1 - W2) + (b1 - b2), f32 accumulation."""
    w_diff = (w1_ref[...] - w2_ref[...]).astype(compute_dtype)
    x = x_ref[...].astype(compute_dtype)
    acc = jnp.dot(x, w_diff, preferred_element_type=jnp.float32)
    b_diff = b1_ref[...].astype(jnp.float32) - b2_ref[...].astype(jnp.float32)
    o_ref[...] = (acc + b_diff).astype(o_ref.dtype)


def _pick_row_tile(padded_batch):
    """Few, fat grid steps.

    Per grid step costs ~0.35 us of pipeline overhead, so use the largest row
    tile that fits VMEM comfortably (<= 512 rows here), while keeping the grid
    a multiple of 2 whenever the batch allows so both v7x TensorCores get work.
    """
    if padded_batch <= 128:
        return padded_batch  # single step; too small to split across cores
    return min(512, _round_up(pl.cdiv(padded_batch, 2), 8))


def sub_forward(x, w1, b1, w2, b2, *, tm=None, use_bf16_matmul=False,
                out_dtype=None):
    """Fused Sub(network1, network2) forward for two affine sub-networks."""
    batch, in_features = x.shape
    out_features = w1.shape[1]
    out_dtype = x.dtype if out_dtype is None else out_dtype

    b1 = jnp.asarray(b1).reshape(1, out_features)
    b2 = jnp.asarray(b2).reshape(1, out_features)

    # Optional bf16 MXU operands (accumulation stays f32 inside the kernel).
    compute_dtype = jnp.bfloat16 if use_bf16_matmul else x.dtype
    x_in = x.astype(jnp.bfloat16) if use_bf16_matmul else x  # halves x DMA bytes

    # Row tiling with padding (handles non-divisible / non-8-aligned batches).
    aligned_batch = _round_up(batch, 8)
    if tm is None:
        tm = _pick_row_tile(aligned_batch)
    tm = max(8, _round_up(min(tm, aligned_batch), 8))
    padded_batch = _round_up(batch, tm)
    if padded_batch != batch:
        x_in = jnp.pad(x_in, ((0, padded_batch - batch), (0, 0)))
    grid = (padded_batch // tm,)

    cost = pl.CostEstimate(
        flops=2 * padded_batch * in_features * out_features,
        transcendentals=0,
        bytes_accessed=(
            padded_batch * in_features * jnp.dtype(x_in.dtype).itemsize
            + 2 * in_features * out_features * jnp.dtype(w1.dtype).itemsize
            + 2 * out_features * jnp.dtype(b1.dtype).itemsize
            + padded_batch * out_features * jnp.dtype(out_dtype).itemsize
        ),
    )

    out = pl.pallas_call(
        functools.partial(_sub_kernel, compute_dtype=compute_dtype),
        out_shape=jax.ShapeDtypeStruct((padded_batch, out_features), out_dtype),
        grid_spec=pltpu.PrefetchScalarGridSpec(
            num_scalar_prefetch=0,
            grid=grid,
            in_specs=[
                pl.BlockSpec((tm, in_features), lambda i: (i, 0)),
                pl.BlockSpec((in_features, out_features), lambda i: (0, 0)),
                pl.BlockSpec((in_features, out_features), lambda i: (0, 0)),
                pl.BlockSpec((1, out_features), lambda i: (0, 0)),
                pl.BlockSpec((1, out_features), lambda i: (0, 0)),
            ],
            out_specs=pl.BlockSpec((tm, out_features), lambda i: (i, 0)),
        ),
        compiler_params=pltpu.CompilerParams(
            dimension_semantics=("parallel",),
        ),
        cost_estimate=cost,
    )(x_in, w1, w2, b1, b2)

    return out[:batch] if padded_batch != batch else out


def reference(x, w1, b1, w2, b2):
    return (x @ w1 + b1) - (x @ w2 + b2)


if __name__ == "__main__":
    key = jax.random.PRNGKey(0)
    k_x, k_w1, k_b1, k_w2, k_b2 = jax.random.split(key, 5)

    # Lane-dense, MXU-aligned demo sizes (multiples of 128/256) so stores are
    # unmasked full-width vst and the MXU columns are fully used.
    batch, in_features, out_features = 256, 256, 256

    x = jax.random.normal(k_x, (batch, in_features), dtype=jnp.float32)
    # Deterministic parameters for network1 and network2 (two affine modules).
    w1 = jax.random.normal(k_w1, (in_features, out_features), jnp.float32) * 0.1
    b1 = jax.random.normal(k_b1, (1, out_features), jnp.float32) * 0.1
    w2 = jax.random.normal(k_w2, (in_features, out_features), jnp.float32) * 0.1
    b2 = jax.random.normal(k_b2, (1, out_features), jnp.float32) * 0.1

    ref = reference(x, w1, b1, w2, b2)

    # f32 MXU operands: only the fold's rounding-order change vs. reference.
    out_f32 = sub_forward(x, w1, b1, w2, b2)
    jax.block_until_ready(out_f32)
    assert out_f32.shape == (batch, out_features)
    assert jnp.allclose(out_f32, ref, atol=1e-4, rtol=1e-4)

    # bf16 MXU operands (f32 accumulation): ~2x MXU throughput, looser numerics.
    out_bf16 = sub_forward(x, w1, b1, w2, b2, use_bf16_matmul=True)
    jax.block_until_ready(out_bf16)
    assert jnp.allclose(out_bf16, ref, atol=1e-1, rtol=1e-2)

    # Non-multiple-of-8 batch exercises the pad-and-slice path (no assert).
    out_ragged = sub_forward(x[:100], w1, b1, w2, b2)
    jax.block_until_ready(out_ragged)
    assert out_ragged.shape == (100, out_features)
    assert jnp.allclose(out_ragged, ref[:100], atol=1e-4, rtol=1e-4)

    print("KERNEL_OK")
</pallas_src>

<mosaic_0001>
module attributes {stable_mosaic.version = 11 : i64} {
  func.func @_sub_kernel(%arg0: i32, %arg1: memref<128x256xf32, #tpu.memory_space<vmem>>, %arg2: memref<256x256xf32, #tpu.memory_space<vmem>>, %arg3: memref<256x256xf32, #tpu.memory_space<vmem>>, %arg4: memref<1x256xf32, #tpu.memory_space<vmem>>, %arg5: memref<1x256xf32, #tpu.memory_space<vmem>>, %arg6: memref<128x256xf32, #tpu.memory_space<vmem>>) attributes {dimension_semantics = [#tpu.dimension_semantics<parallel>], iteration_bounds = array<i64: 2>, scalar_prefetch = 0 : i64, scratch_operands = 0 : i64, tpu.core_type = #tpu.core_type<tc>, window_params = [{transform_indices = @transform_0, window_bounds = array<i64: 128, 256>}, {pipeline_mode = #tpu.pipeline_mode<synchronous>, transform_indices = @transform_1, window_bounds = array<i64: 256, 256>}, {pipeline_mode = #tpu.pipeline_mode<synchronous>, transform_indices = @transform_2, window_bounds = array<i64: 256, 256>}, {pipeline_mode = #tpu.pipeline_mode<synchronous>, transform_indices = @transform_3, window_bounds = array<i64: 1, 256>}, {pipeline_mode = #tpu.pipeline_mode<synchronous>, transform_indices = @transform_4, window_bounds = array<i64: 1, 256>}, {transform_indices = @transform_5, window_bounds = array<i64: 128, 256>}]} {
    %c0 = arith.constant 0 : index
    %c0_0 = arith.constant 0 : index
    %0 = vector.load %arg2[%c0, %c0_0] : memref<256x256xf32, #tpu.memory_space<vmem>>, vector<256x256xf32>
    %c0_1 = arith.constant 0 : index
    %c0_2 = arith.constant 0 : index
    %1 = vector.load %arg3[%c0_1, %c0_2] : memref<256x256xf32, #tpu.memory_space<vmem>>, vector<256x256xf32>
    %2 = arith.subf %0, %1 : vector<256x256xf32>
    %c0_3 = arith.constant 0 : index
    %c0_4 = arith.constant 0 : index
    %3 = vector.load %arg1[%c0_3, %c0_4] : memref<128x256xf32, #tpu.memory_space<vmem>>, vector<128x256xf32>
    %cst = arith.constant dense<0.000000e+00> : vector<128x256xf32>
    %4 = tpu.matmul %3, %2, %cst {dimension_numbers = #tpu.dot_dimension_numbers<[1], [0], [0], [1], [0, 0, 1, 1], [], []>} : vector<128x256xf32>, vector<256x256xf32>, vector<128x256xf32> -> vector<128x256xf32>
    %c0_5 = arith.constant 0 : index
    %c0_6 = arith.constant 0 : index
    %5 = vector.load %arg4[%c0_5, %c0_6] : memref<1x256xf32, #tpu.memory_space<vmem>>, vector<1x256xf32>
    %c0_7 = arith.constant 0 : index
    %c0_8 = arith.constant 0 : index
    %6 = vector.load %arg5[%c0_7, %c0_8] : memref<1x256xf32, #tpu.memory_space<vmem>>, vector<1x256xf32>
    %7 = arith.subf %5, %6 : vector<1x256xf32>
    %8 = vector.broadcast %7 : vector<1x256xf32> to vector<128x256xf32>
    %9 = arith.addf %4, %8 : vector<128x256xf32>
    %c0_9 = arith.constant 0 : index
    %c0_10 = arith.constant 0 : index
    %10 = vector.load %arg6[%c0_9, %c0_10] : memref<128x256xf32, #tpu.memory_space<vmem>>, vector<128x256xf32>
    tpu.vector_store %arg6[%c0_9, %c0_10], %9 {strides = array<i32>} : memref<128x256xf32, #tpu.memory_space<vmem>>, vector<128x256xf32>,
    return
  }
  func.func @transform_0(%arg0: i32) -> (i32, i32) {
    %c0_i32 = arith.constant 0 : i32
    %c0_i32_0 = arith.constant 0 : i32
    return %arg0, %c0_i32 : i32, i32
  }
  func.func @transform_1(%arg0: i32) -> (i32, i32) {
    %c0_i32 = arith.constant 0 : i32
    %c0_i32_0 = arith.constant 0 : i32
    %c0_i32_1 = arith.constant 0 : i32
    return %c0_i32, %c0_i32_0 : i32, i32
  }
  func.func @transform_2(%arg0: i32) -> (i32, i32) {
    %c0_i32 = arith.constant 0 : i32
    %c0_i32_0 = arith.constant 0 : i32
    %c0_i32_1 = arith.constant 0 : i32
    return %c0_i32, %c0_i32_0 : i32, i32
  }
  func.func @transform_3(%arg0: i32) -> (i32, i32) {
    %c0_i32 = arith.constant 0 : i32
    %c0_i32_0 = arith.constant 0 : i32
    %c0_i32_1 = arith.constant 0 : i32
    return %c0_i32, %c0_i32_0 : i32, i32
  }
  func.func @transform_4(%arg0: i32) -> (i32, i32) {
    %c0_i32 = arith.constant 0 : i32
    %c0_i32_0 = arith.constant 0 : i32
    %c0_i32_1 = arith.constant 0 : i32
    return %c0_i32, %c0_i32_0 : i32, i32
  }
  func.func @transform_5(%arg0: i32) -> (i32, i32) {
    %c0_i32 = arith.constant 0 : i32
    %c0_i32_0 = arith.constant 0 : i32
    return %arg0, %c0_i32 : i32, i32
  }
}

</mosaic_0001>

<llo_original>
// kernel: tpu_custom_call.1
$region0: #{tpu_custom_call.1}
  #allocation0 [shape = 'u32[]', space=smem, size = 0x4, offset = 0x4, fixed_abs, tag = 'smem constant byte address 0x4 - core index']
  #allocation1 [shape = 'u32[144,128]{1,0:T(1,128)}', space=vmem, size = 0x12000, scoped, tag = 'internal scratch']
  %s0 = inlined_call_operand.hbm [shape: f32[256,256], index: 0, kind: input, shape index: {}]
  %s1 = inlined_call_operand.hbm [shape: f32[256,256], index: 1, kind: input, shape index: {}]
  %s2 = inlined_call_operand.hbm [shape: f32[256,256], index: 2, kind: input, shape index: {}]
  %s3 = inlined_call_operand.vmem [shape: f32[1,256], index: 3, kind: input, shape index: {}]
  %s4 = inlined_call_operand.vmem [shape: f32[1,256], index: 4, kind: input, shape index: {}]
  %s5 = inlined_call_operand.hbm [shape: f32[256,256], index: 5, kind: output, shape index: {}]
  %s6 = sld [smem:[#allocation0]]
  $region65: #{tpu_custom_call.1} parent=0
    _
  %s8 = ssub.s32 1, %s6
  %s9 = scalar_select 0, %s8, %s6
  $region1: #{tpu_custom_call.1} parent=0
    #allocation2 [shape = 'u8[262144]{0}', space=vmem, size = 0x40000, scoped, tag = 'input window, operand 0']
    #allocation3 [shape = 's32[2]{0}', space=sflag, size = 0x8, scoped, tag = 'scoped memory for tpu_custom_call.1']
    #allocation4 [shape = 's32[2]{0}', space=sflag, size = 0x8, scoped, tag = 'scoped memory for tpu_custom_call.1']
    #allocation5 [shape = 'u8[262144]{0}', space=vmem, size = 0x40000, scoped, tag = 'input window, operand 1, single buffered']
    #allocation6 [shape = 's32[1]{0}', space=sflag, size = 0x4, scoped, tag = 'scoped memory for tpu_custom_call.1']
    #allocation7 [shape = 'u8[262144]{0}', space=vmem, size = 0x40000, scoped, tag = 'input window, operand 2, single buffered']
    #allocation8 [shape = 'u8[262144]{0}', space=vmem, size = 0x40000, scoped, tag = 'output window, operand 0']
    %10 = vsyncpa [#allocation3], 0
    %s11 = scalar_lea.sflag [#allocation3], 1
    %12 = vsyncpa %s11, 0
    %13 = vsyncpa [#allocation6], 0
    %14 = vsyncpa [#allocation4], 0
    %s15 = scalar_lea.sflag [#allocation4], 1
    %16 = vsyncpa %s15, 0
    loop: start=0, step=1, limit=4
    $region2: #{tpu_custom_call.1} parent=1 // loop_pre_header
      _
    $region3: #{tpu_custom_call.1} parent=1 // loop_header
      %s18 = sphi 0, %s22
      %p19 = scmp.ge.s32.totalorder %s18, 4
      %s28 = sphi 0, %s30
      %s31 = sphi 0, %s28
      %s32 = sphi 0, %s31
      %s48 = sphi 0, %s32
      %s52 = sphi 0, %s52
      %s54 = sphi 0, %s52
      %s55 = sphi 0, %s54
      %s69 = sphi 0, %s55
      %s73 = sphi 0, %s73
      %s75 = sphi 0, %s73
      %s76 = sphi 0, %s75
      %s90 = sphi 0, %s76
      %s94 = sphi 0, %s94
      %s96 = sphi 0, %s94
      %s97 = sphi 0, %s96
      %s111 = sphi 0, %s97
      %s115 = sphi 0, %s115
      %s117 = sphi 0, %s115
      %s118 = sphi 0, %s117
      %s132 = sphi 0, %s118
      %s138 = sphi 0, %s140
      %s141 = sphi 0, %s138
      %s142 = sphi 0, %s141
      %s158 = sphi 0, %s142
    $region4: #{tpu_custom_call.1} parent=1 // loop_header_branch
      %21 = sbr.rel (%p19) target = $region8
    $region5: #{tpu_custom_call.1} parent=1 // loop_body
      %s23 = ssub.s32 %s18, 1
      %s24 = ssub.s32 %s18, 2
      %s25 = sadd.s32 %s18, 1
      %s26 = ssub.s32 %s18, %s25
      %p27 = scmp.eq.s32.totalorder %s26, 0
      %s29 = sadd.s32 %s28, 1
      %s30 = scalar_select %p27, %s28, %s29
      %p33 = pneg %p27
      %p34 = scmp.eq.s32.totalorder %s18, 1
      %p35 = por %p33, %p34
      %p36 = scmp.ne.s32.totalorder %s28, %s31
      %p37 = scmp.eq.s32.totalorder %s18, 0
      %p38 = por %p36, %p37
      %p39 = scmp.ne.s32.totalorder %s28, %s31
      %p40 = scmp.eq.s32.totalorder %s23, 1
      %p41 = por %p39, %p40
      %p42 = scmp.ne.s32.totalorder %s31, %s32
      %p43 = scmp.eq.s32.totalorder %s23, 0
      %p44 = por %p42, %p43
      %p45 = scmp.ne.s32.totalorder %s31, %s32
      %p46 = scmp.eq.s32.totalorder %s24, 1
      %p47 = por %p45, %p46
      %p49 = scmp.ne.s32.totalorder %s32, %s48
      %p50 = scmp.eq.s32.totalorder %s24, 0
      %p51 = por %p49, %p50
      %s53 = sadd.s32 %s52, 1
      %p56 = scmp.eq.s32.totalorder %s18, 1
      %p57 = scmp.ne.s32.totalorder %s52, %s54
      %p58 = scmp.eq.s32.totalorder %s18, 0
      %p59 = por %p57, %p58
      %p60 = scmp.ne.s32.totalorder %s52, %s54
      %p61 = scmp.eq.s32.totalorder %s23, 1
      %p62 = por %p60, %p61
      %p63 = scmp.ne.s32.totalorder %s54, %s55
      %p64 = scmp.eq.s32.totalorder %s23, 0
      %p65 = por %p63, %p64
      %p66 = scmp.ne.s32.totalorder %s54, %s55
      %p67 = scmp.eq.s32.totalorder %s24, 1
      %p68 = por %p66, %p67
      %p70 = scmp.ne.s32.totalorder %s55, %s69
      %p71 = scmp.eq.s32.totalorder %s24, 0
      %p72 = por %p70, %p71
      %s74 = sadd.s32 %s73, 1
      %p77 = scmp.eq.s32.totalorder %s18, 1
      %p78 = scmp.ne.s32.totalorder %s73, %s75
      %p79 = scmp.eq.s32.totalorder %s18, 0
      %p80 = por %p78, %p79
      %p81 = scmp.ne.s32.totalorder %s73, %s75
      %p82 = scmp.eq.s32.totalorder %s23, 1
      %p83 = por %p81, %p82
      %p84 = scmp.ne.s32.totalorder %s75, %s76
      %p85 = scmp.eq.s32.totalorder %s23, 0
      %p86 = por %p84, %p85
      %p87 = scmp.ne.s32.totalorder %s75, %s76
      %p88 = scmp.eq.s32.totalorder %s24, 1
      %p89 = por %p87, %p88
      %p91 = scmp.ne.s32.totalorder %s76, %s90
      %p92 = scmp.eq.s32.totalorder %s24, 0
      %p93 = por %p91, %p92
      %s95 = sadd.s32 %s94, 1
      %p98 = scmp.eq.s32.totalorder %s18, 1
      %p99 = scmp.ne.s32.totalorder %s94, %s96
      %p100 = scmp.eq.s32.totalorder %s18, 0
      %p101 = por %p99, %p100
      %p102 = scmp.ne.s32.totalorder %s94, %s96
      %p103 = scmp.eq.s32.totalorder %s23, 1
      %p104 = por %p102, %p103
      %p105 = scmp.ne.s32.totalorder %s96, %s97
      %p106 = scmp.eq.s32.totalorder %s23, 0
      %p107 = por %p105, %p106
      %p108 = scmp.ne.s32.totalorder %s96, %s97
      %p109 = scmp.eq.s32.totalorder %s24, 1
      %p110 = por %p108, %p109
      %p112 = scmp.ne.s32.totalorder %s97, %s111
      %p113 = scmp.eq.s32.totalorder %s24, 0
      %p114 = por %p112, %p113
      %s116 = sadd.s32 %s115, 1
      %p119 = scmp.eq.s32.totalorder %s18, 1
      %p120 = scmp.ne.s32.totalorder %s115, %s117
      %p121 = scmp.eq.s32.totalorder %s18, 0
      %p122 = por %p120, %p121
      %p123 = scmp.ne.s32.totalorder %s115, %s117
      %p124 = scmp.eq.s32.totalorder %s23, 1
      %p125 = por %p123, %p124
      %p126 = scmp.ne.s32.totalorder %s117, %s118
      %p127 = scmp.eq.s32.totalorder %s23, 0
      %p128 = por %p126, %p127
      %p129 = scmp.ne.s32.totalorder %s117, %s118
      %p130 = scmp.eq.s32.totalorder %s24, 1
      %p131 = por %p129, %p130
      %p133 = scmp.ne.s32.totalorder %s118, %s132
      %p134 = scmp.eq.s32.totalorder %s24, 0
      %p135 = por %p133, %p134
      %s136 = ssub.s32 %s18, %s25
      %p137 = scmp.eq.s32.totalorder %s136, 0
      %s139 = sadd.s32 %s138, 1
      %s140 = scalar_select %p137, %s138, %s139
      %p143 = pneg %p137
      %p144 = scmp.eq.s32.totalorder %s18, 1
      %p145 = por %p143, %p144
      %p146 = scmp.ne.s32.totalorder %s138, %s141
      %p147 = scmp.eq.s32.totalorder %s18, 0
      %p148 = por %p146, %p147
      %p149 = scmp.ne.s32.totalorder %s138, %s141
      %p150 = scmp.eq.s32.totalorder %s23, 1
      %p151 = por %p149, %p150
      %p152 = scmp.ne.s32.totalorder %s141, %s142
      %p153 = scmp.eq.s32.totalorder %s23, 0
      %p154 = por %p152, %p153
      %p155 = scmp.ne.s32.totalorder %s141, %s142
      %p156 = scmp.eq.s32.totalorder %s24, 1
      %p157 = por %p155, %p156
      %p159 = scmp.ne.s32.totalorder %s142, %s158
      %p160 = scmp.eq.s32.totalorder %s24, 0
      %p161 = por %p159, %p160
      %p162 = scmp.le.s32.totalorder 1, %s18
      %p163 = scmp.lt.s32.totalorder %s18, 3
      %p164 = pnand %p162, %p163
      %p165 = pneg %p164
      // Predicated region
      $region9: #{tpu_custom_call.1} parent=5 // pred_check
        _
      $region10: #{tpu_custom_call.1} parent=5 // pred_check_branch
        %167 = sbr.rel (%p164) target = $region12
      $region11: #{tpu_custom_call.1} parent=5 // pred_region
        %s168 = ssub.s32 %s18, 1
        // Predicated region
        $region13: #{tpu_custom_call.1} parent=11 // pred_check
          %p169 = pneg %p65
        $region14: #{tpu_custom_call.1} parent=11 // pred_check_branch
          %171 = sbr.rel (%p169) target = $region16
        $region15: #{tpu_custom_call.1} parent=11 // pred_region
          %s173 = ssub.s32 8192, 8192
          %174 = vsyncadd [#allocation6], %s173
          %s175 = sshll.u32 [#allocation5], 4
          %s176 = int_to_ptr.vmem [resolvable:$true] %s175
          %181 = dma.hbm_to_vmem [thread:$0]  %s1, 8192, %s176, [#allocation6], 256, 256, 16
        $region16: #{tpu_custom_call.1} parent=11 // pred_fallthru
          _
        // Predicated region
        $region17: #{tpu_custom_call.1} parent=11 // pred_check
          %p182 = pneg %p86
        $region18: #{tpu_custom_call.1} parent=11 // pred_check_branch
          %184 = sbr.rel (%p182) target = $region20
        $region19: #{tpu_custom_call.1} parent=11 // pred_region
          %s186 = ssub.s32 8192, 8192
          %187 = vsyncadd [#allocation6], %s186
          %s188 = sshll.u32 [#allocation7], 4
          %s189 = int_to_ptr.vmem [resolvable:$true] %s188
          %194 = dma.hbm_to_vmem [thread:$0]  %s2, 8192, %s189, [#allocation6], 256, 256, 16
        $region20: #{tpu_custom_call.1} parent=11 // pred_fallthru
          _
        // Predicated region
        $region21: #{tpu_custom_call.1} parent=11 // pred_check
          %p195 = pneg %p107
        $region22: #{tpu_custom_call.1} parent=11 // pred_check_branch
          %197 = sbr.rel (%p195) target = $region24
        $region23: #{tpu_custom_call.1} parent=11 // pred_region
          _
        $region24: #{tpu_custom_call.1} parent=11 // pred_fallthru
          _
        // Predicated region
        $region25: #{tpu_custom_call.1} parent=11 // pred_check
          %p198 = pneg %p128
        $region26: #{tpu_custom_call.1} parent=11 // pred_check_branch
          %200 = sbr.rel (%p198) target = $region28
        $region27: #{tpu_custom_call.1} parent=11 // pred_region
          _
        $region28: #{tpu_custom_call.1} parent=11 // pred_fallthru
          _
      $region12: #{tpu_custom_call.1} parent=5 // pred_fallthru
        _
      %p201 = scmp.lt.s32.totalorder %s18, 2
      // Predicated region
      $region29: #{tpu_custom_call.1} parent=5 // pred_check
        %p202 = pneg %p201
      $region30: #{tpu_custom_call.1} parent=5 // pred_check_branch
        %204 = sbr.rel (%p202) target = $region32
      $region31: #{tpu_custom_call.1} parent=5 // pred_region
        // Predicated region
        $region33: #{tpu_custom_call.1} parent=31 // pred_check
          %p205 = pneg %p38
        $region34: #{tpu_custom_call.1} parent=31 // pred_check_branch
          %207 = sbr.rel (%p205) target = $region36
        $region35: #{tpu_custom_call.1} parent=31 // pred_region
          %s208 = sand.u32 %s28, 1
          %s209 = scalar_lea.sflag [#allocation3], %s208
          %s210 = sand.u32 %s28, 1
          %s211 = smul.addr %s210, 256
          %s212 = scalar_lea.vmem [#allocation2], %s211
          %s213 = smul.u32 16, %s18
          %s215 = ssub.s32 4096, 4096
          %216 = vsyncadd %s209, %s215
          %s217 = smul.addr %s213, 2
          %s218 = smul.addr %s217, 128
          %s219 = scalar_lea.hbm %s0, %s218
          %s220 = sshll.u32 %s212, 4
          %s221 = int_to_ptr.vmem [resolvable:$true] %s220
          %226 = dma.hbm_to_vmem [thread:$0]  %s219, 4096, %s221, %s209, 256, 256, 16
        $region36: #{tpu_custom_call.1} parent=31 // pred_fallthru
          _
      $region32: #{tpu_custom_call.1} parent=5 // pred_fallthru
        _
      %p227 = scmp.le.s32.totalorder 1, %s18
      %p228 = scmp.lt.s32.totalorder %s18, 3
      %p229 = pnand %p227, %p228
      %p230 = pneg %p229
      // Predicated region
      $region37: #{tpu_custom_call.1} parent=5 // pred_check
        _
      $region38: #{tpu_custom_call.1} parent=5 // pred_check_branch
        %232 = sbr.rel (%p229) target = $region40
      $region39: #{tpu_custom_call.1} parent=5 // pred_region
        %s233 = ssub.s32 %s18, 1
        %s234 = sand.u32 %s31, 1
        %s235 = scalar_lea.sflag [#allocation3], %s234
        %s236 = sand.u32 %s31, 1
        %s237 = smul.addr %s236, 256
        %s238 = scalar_lea.vmem [#allocation2], %s237
        // Predicated region
        $region41: #{tpu_custom_call.1} parent=39 // pred_check
          %p239 = pneg %p44
        $region42: #{tpu_custom_call.1} parent=39 // pred_check_branch
          %241 = sbr.rel (%p239) target = $region44
        $region43: #{tpu_custom_call.1} parent=39 // pred_region
          %242 = dma.done %s235, 4096
        $region44: #{tpu_custom_call.1} parent=39 // pred_fallthru
          _
        // Predicated region
        $region45: #{tpu_custom_call.1} parent=39 // pred_check
          %p243 = pneg %p65
        $region46: #{tpu_custom_call.1} parent=39 // pred_check_branch
          %245 = sbr.rel (%p243) target = $region48
        $region47: #{tpu_custom_call.1} parent=39 // pred_region
          %246 = dma.done [#allocation6], 8192
        $region48: #{tpu_custom_call.1} parent=39 // pred_fallthru
          _
        // Predicated region
        $region49: #{tpu_custom_call.1} parent=39 // pred_check
          %p247 = pneg %p86
        $region50: #{tpu_custom_call.1} parent=39 // pred_check_branch
          %249 = sbr.rel (%p247) target = $region52
        $region51: #{tpu_custom_call.1} parent=39 // pred_region
          %250 = dma.done [#allocation6], 8192
        $region52: #{tpu_custom_call.1} parent=39 // pred_fallthru
          _
        %s251 = sand.u32 %s31, 1
        %s252 = scalar_lea.sflag [#allocation3], %s251
        %s253 = sand.u32 %s31, 1
        %s254 = smul.addr %s253, 256
        %s255 = scalar_lea.vmem [#allocation2], %s254
        %p256 = pneg %p44
        %p257 = pneg %p41
        %p258 = pneg %p65
        %p259 = pneg %p62
        %p260 = pneg %p86
        %p261 = pneg %p83
        %p262 = pneg %p107
        %p263 = pneg %p104
        %p264 = pneg %p128
        %p265 = pneg %p125
        %p266 = pneg %p154
        %p267 = pneg %p151
        %s268 = sand.u32 %s141, 1
        %s269 = scalar_lea.sflag [#allocation4], %s268
        %s270 = sand.u32 %s141, 1
        %s271 = smul.addr %s270, 256
        %s272 = scalar_lea.vmem [#allocation8], %s271
        %s273 = smul.u32 16, %s23
        %s274 = smul.u32 16, %s23
        %v275 = vld [vmem:[#allocation5] sm:$0xff]
        %v276 = vld [vmem:[#allocation5 + $0x8] sm:$0xff]
        %v277 = vld [vmem:[#allocation5 + $0x10] sm:$0xff]
        %v278 = vld [vmem:[#allocation5 + $0x18] sm:$0xff]
        %v279 = vld [vmem:[#allocation5 + $0x20] sm:$0xff]
        %v280 = vld [vmem:[#allocation5 + $0x28] sm:$0xff]
        %v281 = vld [vmem:[#allocation5 + $0x30] sm:$0xff]
        %v282 = vld [vmem:[#allocation5 + $0x38] sm:$0xff]
        %v283 = vld [vmem:[#allocation5 + $0x40] sm:$0xff]
        %v284 = vld [vmem:[#allocation5 + $0x48] sm:$0xff]
        %v285 = vld [vmem:[#allocation5 + $0x50] sm:$0xff]
        %v286 = vld [vmem:[#allocation5 + $0x58] sm:$0xff]
        %v287 = vld [vmem:[#allocation5 + $0x60] sm:$0xff]
        %v288 = vld [vmem:[#allocation5 + $0x68] sm:$0xff]
        %v289 = vld [vmem:[#allocation5 + $0x70] sm:$0xff]
        %v290 = vld [vmem:[#allocation5 + $0x78] sm:$0xff]
        %v291 = vld [vmem:[#allocation5 + $0x80] sm:$0xff]
        %v292 = vld [vmem:[#allocation5 + $0x88] sm:$0xff]
        %v293 = vld [vmem:[#allocation5 + $0x90] sm:$0xff]
        %v294 = vld [vmem:[#allocation5 + $0x98] sm:$0xff]
        %v295 = vld [vmem:[#allocation5 + $0xa0] sm:$0xff]
        %v296 = vld [vmem:[#allocation5 + $0xa8] sm:$0xff]
        %v297 = vld [vmem:[#allocation5 + $0xb0] sm:$0xff]
        %v298 = vld [vmem:[#allocation5 + $0xb8] sm:$0xff]
        %v299 = vld [vmem:[#allocation5 + $0xc0] sm:$0xff]
        %v300 = vld [vmem:[#allocation5 + $0xc8] sm:$0xff]
        %v301 = vld [vmem:[#allocation5 + $0xd0] sm:$0xff]
        %v302 = vld [vmem:[#allocation5 + $0xd8] sm:$0xff]
        %v303 = vld [vmem:[#allocation5 + $0xe0] sm:$0xff]
        %v304 = vld [vmem:[#allocation5 + $0xe8] sm:$0xff]
        %v305 = vld [vmem:[#allocation5 + $0xf0] sm:$0xff]
        %v306 = vld [vmem:[#allocation5 + $0xf8] sm:$0xff]
        %v307 = vld [vmem:[#allocation5 + $0x100] sm:$0xff]
        %v308 = vld [vmem:[#allocation5 + $0x108] sm:$0xff]
        %v309 = vld [vmem:[#allocation5 + $0x110] sm:$0xff]
        %v310 = vld [vmem:[#allocation5 + $0x118] sm:$0xff]
        %v311 = vld [vmem:[#allocation5 + $0x120] sm:$0xff]
        %v312 = vld [vmem:[#allocation5 + $0x128] sm:$0xff]
        %v313 = vld [vmem:[#allocation5 + $0x130] sm:$0xff]
        %v314 = vld [vmem:[#allocation5 + $0x138] sm:$0xff]
        %v315 = vld [vmem:[#allocation5 + $0x140] sm:$0xff]
        %v316 = vld [vmem:[#allocation5 + $0x148] sm:$0xff]
        %v317 = vld [vmem:[#allocation5 + $0x150] sm:$0xff]
        %v318 = vld [vmem:[#allocation5 + $0x158] sm:$0xff]
        %v319 = vld [vmem:[#allocation5 + $0x160] sm:$0xff]
        %v320 = vld [vmem:[#allocation5 + $0x168] sm:$0xff]
        %v321 = vld [vmem:[#allocation5 + $0x170] sm:$0xff]
        %v322 = vld [vmem:[#allocation5 + $0x178] sm:$0xff]
        %v323 = vld [vmem:[#allocation5 + $0x180] sm:$0xff]
        %v324 = vld [vmem:[#allocation5 + $0x188] sm:$0xff]
        %v325 = vld [vmem:[#allocation5 + $0x190] sm:$0xff]
        %v326 = vld [vmem:[#allocation5 + $0x198] sm:$0xff]
        %v327 = vld [vmem:[#allocation5 + $0x1a0] sm:$0xff]
        %v328 = vld [vmem:[#allocation5 + $0x1a8] sm:$0xff]
        %v329 = vld [vmem:[#allocation5 + $0x1b0] sm:$0xff]
        %v330 = vld [vmem:[#allocation5 + $0x1b8] sm:$0xff]
        %v331 = vld [vmem:[#allocation5 + $0x1c0] sm:$0xff]
        %v332 = vld [vmem:[#allocation5 + $0x1c8] sm:$0xff]
        %v333 = vld [vmem:[#allocation5 + $0x1d0] sm:$0xff]
        %v334 = vld [vmem:[#allocation5 + $0x1d8] sm:$0xff]
        %v335 = vld [vmem:[#allocation5 + $0x1e0] sm:$0xff]
        %v336 = vld [vmem:[#allocation5 + $0x1e8] sm:$0xff]
        %v337 = vld [vmem:[#allocation5 + $0x1f0] sm:$0xff]
        %v338 = vld [vmem:[#allocation5 + $0x1f8] sm:$0xff]
        %v339 = vld [vmem:[#allocation7] sm:$0xff]
        %v340 = vld [vmem:[#allocation7 + $0x8] sm:$0xff]
        %v341 = vld [vmem:[#allocation7 + $0x10] sm:$0xff]
        %v342 = vld [vmem:[#allocation7 + $0x18] sm:$0xff]
        %v343 = vld [vmem:[#allocation7 + $0x20] sm:$0xff]
        %v344 = vld [vmem:[#allocation7 + $0x28] sm:$0xff]
        %v345 = vld [vmem:[#allocation7 + $0x30] sm:$0xff]
        %v346 = vld [vmem:[#allocation7 + $0x38] sm:$0xff]
        %v347 = vld [vmem:[#allocation7 + $0x40] sm:$0xff]
        %v348 = vld [vmem:[#allocation7 + $0x48] sm:$0xff]
        %v349 = vld [vmem:[#allocation7 + $0x50] sm:$0xff]
        %v350 = vld [vmem:[#allocation7 + $0x58] sm:$0xff]
        %v351 = vld [vmem:[#allocation7 + $0x60] sm:$0xff]
        %v352 = vld [vmem:[#allocation7 + $0x68] sm:$0xff]
        %v353 = vld [vmem:[#allocation7 + $0x70] sm:$0xff]
        %v354 = vld [vmem:[#allocation7 + $0x78] sm:$0xff]
        %v355 = vld [vmem:[#allocation7 + $0x80] sm:$0xff]
        %v356 = vld [vmem:[#allocation7 + $0x88] sm:$0xff]
        %v357 = vld [vmem:[#allocation7 + $0x90] sm:$0xff]
        %v358 = vld [vmem:[#allocation7 + $0x98] sm:$0xff]
        %v359 = vld [vmem:[#allocation7 + $0xa0] sm:$0xff]
        %v360 = vld [vmem:[#allocation7 + $0xa8] sm:$0xff]
        %v361 = vld [vmem:[#allocation7 + $0xb0] sm:$0xff]
        %v362 = vld [vmem:[#allocation7 + $0xb8] sm:$0xff]
        %v363 = vld [vmem:[#allocation7 + $0xc0] sm:$0xff]
        %v364 = vld [vmem:[#allocation7 + $0xc8] sm:$0xff]
        %v365 = vld [vmem:[#allocation7 + $0xd0] sm:$0xff]
        %v366 = vld [vmem:[#allocation7 + $0xd8] sm:$0xff]
        %v367 = vld [vmem:[#allocation7 + $0xe0] sm:$0xff]
        %v368 = vld [vmem:[#allocation7 + $0xe8] sm:$0xff]
        %v369 = vld [vmem:[#allocation7 + $0xf0] sm:$0xff]
        %v370 = vld [vmem:[#allocation7 + $0xf8] sm:$0xff]
        %v371 = vld [vmem:[#allocation7 + $0x100] sm:$0xff]
        %v372 = vld [vmem:[#allocation7 + $0x108] sm:$0xff]
        %v373 = vld [vmem:[#allocation7 + $0x110] sm:$0xff]
        %v374 = vld [vmem:[#allocation7 + $0x118] sm:$0xff]
        %v375 = vld [vmem:[#allocation7 + $0x120] sm:$0xff]
        %v376 = vld [vmem:[#allocation7 + $0x128] sm:$0xff]
        %v377 = vld [vmem:[#allocation7 + $0x130] sm:$0xff]
        %v378 = vld [vmem:[#allocation7 + $0x138] sm:$0xff]
        %v379 = vld [vmem:[#allocation7 + $0x140] sm:$0xff]
        %v380 = vld [vmem:[#allocation7 + $0x148] sm:$0xff]
        %v381 = vld [vmem:[#allocation7 + $0x150] sm:$0xff]
        %v382 = vld [vmem:[#allocation7 + $0x158] sm:$0xff]
        %v383 = vld [vmem:[#allocation7 + $0x160] sm:$0xff]
        %v384 = vld [vmem:[#allocation7 + $0x168] sm:$0xff]
        %v385 = vld [vmem:[#allocation7 + $0x170] sm:$0xff]
        %v386 = vld [vmem:[#allocation7 + $0x178] sm:$0xff]
        %v387 = vld [vmem:[#allocation7 + $0x180] sm:$0xff]
        %v388 = vld [vmem:[#allocation7 + $0x188] sm:$0xff]
        %v389 = vld [vmem:[#allocation7 + $0x190] sm:$0xff]
        %v390 = vld [vmem:[#allocation7 + $0x198] sm:$0xff]
        %v391 = vld [vmem:[#allocation7 + $0x1a0] sm:$0xff]
        %v392 = vld [vmem:[#allocation7 + $0x1a8] sm:$0xff]
        %v393 = vld [vmem:[#allocation7 + $0x1b0] sm:$0xff]
        %v394 = vld [vmem:[#allocation7 + $0x1b8] sm:$0xff]
        %v395 = vld [vmem:[#allocation7 + $0x1c0] sm:$0xff]
        %v396 = vld [vmem:[#allocation7 + $0x1c8] sm:$0xff]
        %v397 = vld [vmem:[#allocation7 + $0x1d0] sm:$0xff]
        %v398 = vld [vmem:[#allocation7 + $0x1d8] sm:$0xff]
        %v399 = vld [vmem:[#allocation7 + $0x1e0] sm:$0xff]
        %v400 = vld [vmem:[#allocation7 + $0x1e8] sm:$0xff]
        %v401 = vld [vmem:[#allocation7 + $0x1f0] sm:$0xff]
        %v402 = vld [vmem:[#allocation7 + $0x1f8] sm:$0xff]
        %v403 = vsub.f32 %v275, %v339
        %v404 = vsub.f32 %v276, %v340
        %v405 = vsub.f32 %v277, %v341
        %v406 = vsub.f32 %v278, %v342
        %v407 = vsub.f32 %v279, %v343
        %v408 = vsub.f32 %v280, %v344
        %v409 = vsub.f32 %v281, %v345
        %v410 = vsub.f32 %v282, %v346
        %v411 = vsub.f32 %v283, %v347
        %v412 = vsub.f32 %v284, %v348
        %v413 = vsub.f32 %v285, %v349
        %v414 = vsub.f32 %v286, %v350
        %v415 = vsub.f32 %v287, %v351
        %v416 = vsub.f32 %v288, %v352
        %v417 = vsub.f32 %v289, %v353
        %v418 = vsub.f32 %v290, %v354
        %v419 = vsub.f32 %v291, %v355
        %v420 = vsub.f32 %v292, %v356
        %v421 = vsub.f32 %v293, %v357
        %v422 = vsub.f32 %v294, %v358
        %v423 = vsub.f32 %v295, %v359
        %v424 = vsub.f32 %v296, %v360
        %v425 = vsub.f32 %v297, %v361
        %v426 = vsub.f32 %v298, %v362
        %v427 = vsub.f32 %v299, %v363
        %v428 = vsub.f32 %v300, %v364
        %v429 = vsub.f32 %v301, %v365
        %v430 = vsub.f32 %v302, %v366
        %v431 = vsub.f32 %v303, %v367
        %v432 = vsub.f32 %v304, %v368
        %v433 = vsub.f32 %v305, %v369
        %v434 = vsub.f32 %v306, %v370
        %v435 = vsub.f32 %v307, %v371
        %v436 = vsub.f32 %v308, %v372
        %v437 = vsub.f32 %v309, %v373
        %v438 = vsub.f32 %v310, %v374
        %v439 = vsub.f32 %v311, %v375
        %v440 = vsub.f32 %v312, %v376
        %v441 = vsub.f32 %v313, %v377
        %v442 = vsub.f32 %v314, %v378
        %v443 = vsub.f32 %v315, %v379
        %v444 = vsub.f32 %v316, %v380
        %v445 = vsub.f32 %v317, %v381
        %v446 = vsub.f32 %v318, %v382
        %v447 = vsub.f32 %v319, %v383
        %v448 = vsub.f32 %v320, %v384
        %v449 = vsub.f32 %v321, %v385
        %v450 = vsub.f32 %v322, %v386
        %v451 = vsub.f32 %v323, %v387
        %v452 = vsub.f32 %v324, %v388
        %v453 = vsub.f32 %v325, %v389
        %v454 = vsub.f32 %v326, %v390
        %v455 = vsub.f32 %v327, %v391
        %v456 = vsub.f32 %v328, %v392
        %v457 = vsub.f32 %v329, %v393
        %v458 = vsub.f32 %v330, %v394
        %v459 = vsub.f32 %v331, %v395
        %v460 = vsub.f32 %v332, %v396
        %v461 = vsub.f32 %v333, %v397
        %v462 = vsub.f32 %v334, %v398
        %v463 = vsub.f32 %v335, %v399
        %v464 = vsub.f32 %v336, %v400
        %v465 = vsub.f32 %v337, %v401
        %v466 = vsub.f32 %v338, %v402
        %v467 = vld [vmem:[%s238] sm:$0xff]
        %v468 = vld [vmem:[%s238 + $0x8] sm:$0xff]
        %v469 = vld [vmem:[%s238 + $0x10] sm:$0xff]
        %v470 = vld [vmem:[%s238 + $0x18] sm:$0xff]
        %v471 = vld [vmem:[%s238 + $0x20] sm:$0xff]
        %v472 = vld [vmem:[%s238 + $0x28] sm:$0xff]
        %v473 = vld [vmem:[%s238 + $0x30] sm:$0xff]
        %v474 = vld [vmem:[%s238 + $0x38] sm:$0xff]
        %v475 = vld [vmem:[%s238 + $0x40] sm:$0xff]
        %v476 = vld [vmem:[%s238 + $0x48] sm:$0xff]
        %v477 = vld [vmem:[%s238 + $0x50] sm:$0xff]
        %v478 = vld [vmem:[%s238 + $0x58] sm:$0xff]
        %v479 = vld [vmem:[%s238 + $0x60] sm:$0xff]
        %v480 = vld [vmem:[%s238 + $0x68] sm:$0xff]
        %v481 = vld [vmem:[%s238 + $0x70] sm:$0xff]
        %v482 = vld [vmem:[%s238 + $0x78] sm:$0xff]
        %v483 = vld [vmem:[%s238 + $0x80] sm:$0xff]
        %v484 = vld [vmem:[%s238 + $0x88] sm:$0xff]
        %v485 = vld [vmem:[%s238 + $0x90] sm:$0xff]
        %v486 = vld [vmem:[%s238 + $0x98] sm:$0xff]
        %v487 = vld [vmem:[%s238 + $0xa0] sm:$0xff]
        %v488 = vld [vmem:[%s238 + $0xa8] sm:$0xff]
        %v489 = vld [vmem:[%s238 + $0xb0] sm:$0xff]
        %v490 = vld [vmem:[%s238 + $0xb8] sm:$0xff]
        %v491 = vld [vmem:[%s238 + $0xc0] sm:$0xff]
        %v492 = vld [vmem:[%s238 + $0xc8] sm:$0xff]
        %v493 = vld [vmem:[%s238 + $0xd0] sm:$0xff]
        %v494 = vld [vmem:[%s238 + $0xd8] sm:$0xff]
        %v495 = vld [vmem:[%s238 + $0xe0] sm:$0xff]
        %v496 = vld [vmem:[%s238 + $0xe8] sm:$0xff]
        %v497 = vld [vmem:[%s238 + $0xf0] sm:$0xff]
        %v498 = vld [vmem:[%s238 + $0xf8] sm:$0xff]
        %v499 = vld [vmem:[%s3] sm:$0x3]
        %v500 = vld [vmem:[%s4] sm:$0x3]
        %v501 = vsub.f32 %v499, %v500
        %v503 = vlaneseq
        %v504 = vshrl.u32 %v503, 7
        %v505 = vsub.s32 0, %v504
        %v506 = vrot.slane %v501, %v505
        %v507 = vlaneseq
        %v508 = vshrl.u32 %v507, 7
        %v509 = vsub.s32 1, %v508
        %v510 = vrot.slane %v501, %v509
        %513 = vmatprep.subr.mxu0 %v434
        %514 = vmatpush1.msra.mxu0 %v433
        %515 = vmatprep.subr.mxu0 %v432
        %516 = vmatpush1.msra.mxu0 %v431
        %517 = vmatprep.subr.mxu0 %v430
        %518 = vmatpush1.msra.mxu0 %v429
        %519 = vmatprep.subr.mxu0 %v428
        %520 = vmatpush1.msra.mxu0 %v427
        %521 = vmatprep.subr.mxu0 %v426
        %522 = vmatpush1.msra.mxu0 %v425
        %523 = vmatprep.subr.mxu0 %v424
        %524 = vmatpush1.msra.mxu0 %v423
        %525 = vmatprep.subr.mxu0 %v422
        %526 = vmatpush1.msra.mxu0 %v421
        %527 = vmatprep.subr.mxu0 %v420
        %528 = vmatpush1.msra.mxu0 %v419
        %529 = vmatprep.subr.mxu0 %v418
        %530 = vmatpush1.msra.mxu0 %v417
        %531 = vmatprep.subr.mxu0 %v416
        %532 = vmatpush1.msra.mxu0 %v415
        %533 = vmatprep.subr.mxu0 %v414
        %534 = vmatpush1.msra.mxu0 %v413
        %535 = vmatprep.subr.mxu0 %v412
        %536 = vmatpush1.msra.mxu0 %v411
        %537 = vmatprep.subr.mxu0 %v410
        %538 = vmatpush1.msra.mxu0 %v409
        %539 = vmatprep.subr.mxu0 %v408
        %540 = vmatpush1.msra.mxu0 %v407
        %541 = vmatprep.subr.mxu0 %v406
        %542 = vmatpush1.msra.mxu0 %v405
        %543 = vmatprep.subr.mxu0 %v404
        %544 = vmatpush1.msra.mxu0 %v403
        %545 = vmatprep.subr.mxu0 %v466
        %546 = vmatpush2.msra.mxu0 %v465
        %547 = vmatprep.subr.mxu0 %v464
        %548 = vmatpush2.msra.mxu0 %v463
        %549 = vmatprep.subr.mxu0 %v462
        %550 = vmatpush2.msra.mxu0 %v461
        %551 = vmatprep.subr.mxu0 %v460
        %552 = vmatpush2.msra.mxu0 %v459
        %553 = vmatprep.subr.mxu0 %v458
        %554 = vmatpush2.msra.mxu0 %v457
        %555 = vmatprep.subr.mxu0 %v456
        %556 = vmatpush2.msra.mxu0 %v455
        %557 = vmatprep.subr.mxu0 %v454
        %558 = vmatpush2.msra.mxu0 %v453
        %559 = vmatprep.subr.mxu0 %v452
        %560 = vmatpush2.msra.mxu0 %v451
        %561 = vmatprep.subr.mxu0 %v450
        %562 = vmatpush2.msra.mxu0 %v449
        %563 = vmatprep.subr.mxu0 %v448
        %564 = vmatpush2.msra.mxu0 %v447
        %565 = vmatprep.subr.mxu0 %v446
        %566 = vmatpush2.msra.mxu0 %v445
        %567 = vmatprep.subr.mxu0 %v444
        %568 = vmatpush2.msra.mxu0 %v443
        %569 = vmatprep.subr.mxu0 %v442
        %570 = vmatpush2.msra.mxu0 %v441
        %571 = vmatprep.subr.mxu0 %v440
        %572 = vmatpush2.msra.mxu0 %v439
        %573 = vmatprep.subr.mxu0 %v438
        %574 = vmatpush2.msra.mxu0 %v437
        %575 = vmatprep.subr.mxu0 %v436
        %576 = vmatpush2.msra.mxu0 %v435
        %577 = vmatprep.mubr.f32.mxu0 %v468
        %578 = vmatmul.mubr.f32.gmra.mxu0 %v467
        %v579 = vpop.f32.mrf.mxu0
        %v580 = vadd.f32 %v506, %v579
        %v581 = vpop.f32.mrf.mxu0
        %v582 = vadd.f32 %v510, %v581
        %583 = vmatprep.mubr.f32.mxu0 %v470
        %584 = vmatmul.mubr.f32.gmra.mxu0 %v469
        %v585 = vpop.f32.mrf.mxu0
        %v586 = vadd.f32 %v506, %v585
        %v587 = vpop.f32.mrf.mxu0
        %v588 = vadd.f32 %v510, %v587
        %589 = vmatprep.mubr.f32.mxu0 %v472
        %590 = vmatmul.mubr.f32.gmra.mxu0 %v471
        %v591 = vpop.f32.mrf.mxu0
        %v592 = vadd.f32 %v506, %v591
        %v593 = vpop.f32.mrf.mxu0
        %v594 = vadd.f32 %v510, %v593
        %595 = vmatprep.mubr.f32.mxu0 %v474
        %596 = vmatmul.mubr.f32.gmra.mxu0 %v473
        %v597 = vpop.f32.mrf.mxu0
        %v598 = vadd.f32 %v506, %v597
        %v599 = vpop.f32.mrf.mxu0
        %v600 = vadd.f32 %v510, %v599
        %601 = vmatprep.mubr.f32.mxu0 %v476
        %602 = vmatmul.mubr.f32.gmra.mxu0 %v475
        %v603 = vpop.f32.mrf.mxu0
        %v604 = vadd.f32 %v506, %v603
        %v605 = vpop.f32.mrf.mxu0
        %v606 = vadd.f32 %v510, %v605
        %607 = vmatprep.mubr.f32.mxu0 %v478
        %608 = vmatmul.mubr.f32.gmra.mxu0 %v477
        %v609 = vpop.f32.mrf.mxu0
        %v610 = vadd.f32 %v506, %v609
        %v611 = vpop.f32.mrf.mxu0
        %v612 = vadd.f32 %v510, %v611
        %613 = vmatprep.mubr.f32.mxu0 %v480
        %614 = vmatmul.mubr.f32.gmra.mxu0 %v479
        %v615 = vpop.f32.mrf.mxu0
        %v616 = vadd.f32 %v506, %v615
        %v617 = vpop.f32.mrf.mxu0
        %v618 = vadd.f32 %v510, %v617
        %619 = vmatprep.mubr.f32.mxu0 %v482
        %620 = vmatmul.mubr.f32.gmra.mxu0 %v481
        %v621 = vpop.f32.mrf.mxu0
        %v622 = vadd.f32 %v506, %v621
        %v623 = vpop.f32.mrf.mxu0
        %v624 = vadd.f32 %v510, %v623
        %625 = vmatprep.mubr.f32.mxu0 %v484
        %626 = vmatmul.mubr.f32.gmra.mxu0 %v483
        %v627 = vpop.f32.mrf.mxu0
        %v628 = vadd.f32 %v506, %v627
        %v629 = vpop.f32.mrf.mxu0
        %v630 = vadd.f32 %v510, %v629
        %631 = vmatprep.mubr.f32.mxu0 %v486
        %632 = vmatmul.mubr.f32.gmra.mxu0 %v485
        %v633 = vpop.f32.mrf.mxu0
        %v634 = vadd.f32 %v506, %v633
        %v635 = vpop.f32.mrf.mxu0
        %v636 = vadd.f32 %v510, %v635
        %637 = vmatprep.mubr.f32.mxu0 %v488
        %638 = vmatmul.mubr.f32.gmra.mxu0 %v487
        %v639 = vpop.f32.mrf.mxu0
        %v640 = vadd.f32 %v506, %v639
        %v641 = vpop.f32.mrf.mxu0
        %v642 = vadd.f32 %v510, %v641
        %643 = vmatprep.mubr.f32.mxu0 %v490
        %644 = vmatmul.mubr.f32.gmra.mxu0 %v489
        %v645 = vpop.f32.mrf.mxu0
        %v646 = vadd.f32 %v506, %v645
        %v647 = vpop.f32.mrf.mxu0
        %v648 = vadd.f32 %v510, %v647
        %649 = vmatprep.mubr.f32.mxu0 %v492
        %650 = vmatmul.mubr.f32.gmra.mxu0 %v491
        %v651 = vpop.f32.mrf.mxu0
        %v652 = vadd.f32 %v506, %v651
        %v653 = vpop.f32.mrf.mxu0
        %v654 = vadd.f32 %v510, %v653
        %655 = vmatprep.mubr.f32.mxu0 %v494
        %656 = vmatmul.mubr.f32.gmra.mxu0 %v493
        %v657 = vpop.f32.mrf.mxu0
        %v658 = vadd.f32 %v506, %v657
        %v659 = vpop.f32.mrf.mxu0
        %v660 = vadd.f32 %v510, %v659
        %661 = vmatprep.mubr.f32.mxu0 %v496
        %662 = vmatmul.mubr.f32.gmra.mxu0 %v495
        %v663 = vpop.f32.mrf.mxu0
        %v664 = vadd.f32 %v506, %v663
        %v665 = vpop.f32.mrf.mxu0
        %v666 = vadd.f32 %v510, %v665
        %667 = vmatprep.mubr.f32.mxu0 %v498
        %668 = vmatmul.mubr.f32.gmra.mxu0 %v497
        %v669 = vpop.f32.mrf.mxu0
        %v670 = vadd.f32 %v506, %v669
        %v671 = vpop.f32.mrf.mxu0
        %v672 = vadd.f32 %v510, %v671
        %673 = vdwg.mxu0
        %674 = vst [vmem:[%s272] sm:$0xff] %v580
        %675 = vst [vmem:[%s272 + $0x8] sm:$0xff] %v582
        %676 = vst [vmem:[%s272 + $0x10] sm:$0xff] %v586
        %677 = vst [vmem:[%s272 + $0x18] sm:$0xff] %v588
        %678 = vst [vmem:[%s272 + $0x20] sm:$0xff] %v592
        %679 = vst [vmem:[%s272 + $0x28] sm:$0xff] %v594
        %680 = vst [vmem:[%s272 + $0x30] sm:$0xff] %v598
        %681 = vst [vmem:[%s272 + $0x38] sm:$0xff] %v600
        %682 = vst [vmem:[%s272 + $0x40] sm:$0xff] %v604
        %683 = vst [vmem:[%s272 + $0x48] sm:$0xff] %v606
        %684 = vst [vmem:[%s272 + $0x50] sm:$0xff] %v610
        %685 = vst [vmem:[%s272 + $0x58] sm:$0xff] %v612
        %686 = vst [vmem:[%s272 + $0x60] sm:$0xff] %v616
        %687 = vst [vmem:[%s272 + $0x68] sm:$0xff] %v618
        %688 = vst [vmem:[%s272 + $0x70] sm:$0xff] %v622
        %689 = vst [vmem:[%s272 + $0x78] sm:$0xff] %v624
        %690 = vst [vmem:[%s272 + $0x80] sm:$0xff] %v628
        %691 = vst [vmem:[%s272 + $0x88] sm:$0xff] %v630
        %692 = vst [vmem:[%s272 + $0x90] sm:$0xff] %v634
        %693 = vst [vmem:[%s272 + $0x98] sm:$0xff] %v636
        %694 = vst [vmem:[%s272 + $0xa0] sm:$0xff] %v640
        %695 = vst [vmem:[%s272 + $0xa8] sm:$0xff] %v642
        %696 = vst [vmem:[%s272 + $0xb0] sm:$0xff] %v646
        %697 = vst [vmem:[%s272 + $0xb8] sm:$0xff] %v648
        %698 = vst [vmem:[%s272 + $0xc0] sm:$0xff] %v652
        %699 = vst [vmem:[%s272 + $0xc8] sm:$0xff] %v654
        %700 = vst [vmem:[%s272 + $0xd0] sm:$0xff] %v658
        %701 = vst [vmem:[%s272 + $0xd8] sm:$0xff] %v660
        %702 = vst [vmem:[%s272 + $0xe0] sm:$0xff] %v664
        %703 = vst [vmem:[%s272 + $0xe8] sm:$0xff] %v666
        %704 = vst [vmem:[%s272 + $0xf0] sm:$0xff] %v670
        %705 = vst [vmem:[%s272 + $0xf8] sm:$0xff] %v672
        %s706 = sand.u32 %s141, 1
        %s707 = scalar_lea.sflag [#allocation4], %s706
        %s708 = sand.u32 %s141, 1
        %s709 = smul.addr %s708, 256
        %s710 = scalar_lea.vmem [#allocation8], %s709
        // Predicated region
        $region53: #{tpu_custom_call.1} parent=39 // pred_check
          %p711 = pneg %p151
        $region54: #{tpu_custom_call.1} parent=39 // pred_check_branch
          %713 = sbr.rel (%p711) target = $region56
        $region55: #{tpu_custom_call.1} parent=39 // pred_region
          %s714 = smul.u32 16, %s23
          %s716 = ssub.s32 4096, 4096
          %717 = vsyncadd %s707, %s716
          %s718 = smul.addr %s714, 2
          %s719 = smul.addr %s718, 128
          %s720 = scalar_lea.hbm %s5, %s719
          %s721 = sshll.u32 %s710, 4
          %s722 = int_to_ptr.vmem [resolvable:$true] %s721
          %727 = dma.vmem_to_hbm [thread:$0]  %s722, 4096, %s720, %s707, 256, 256, 16
        $region56: #{tpu_custom_call.1} parent=39 // pred_fallthru
          _
      $region40: #{tpu_custom_call.1} parent=5 // pred_fallthru
        _
      %p728 = scmp.le.s32.totalorder 2, %s18
      // Predicated region
      $region57: #{tpu_custom_call.1} parent=5 // pred_check
        %p729 = pneg %p728
      $region58: #{tpu_custom_call.1} parent=5 // pred_check_branch
        %731 = sbr.rel (%p729) target = $region60
      $region59: #{tpu_custom_call.1} parent=5 // pred_region
        %s732 = ssub.s32 %s18, 2
        // Predicated region
        $region61: #{tpu_custom_call.1} parent=59 // pred_check
          %p733 = pneg %p157
        $region62: #{tpu_custom_call.1} parent=59 // pred_check_branch
          %735 = sbr.rel (%p733) target = $region64
        $region63: #{tpu_custom_call.1} parent=59 // pred_region
          %s736 = sand.u32 %s142, 1
          %s737 = scalar_lea.sflag [#allocation4], %s736
          %s738 = sand.u32 %s142, 1
          %s739 = smul.addr %s738, 256
          %s740 = scalar_lea.vmem [#allocation8], %s739
          %741 = dma.done %s737, 4096
        $region64: #{tpu_custom_call.1} parent=59 // pred_fallthru
          _
      $region60: #{tpu_custom_call.1} parent=5 // pred_fallthru
        _
    $region6: #{tpu_custom_call.1} parent=1 // loop_footer
      %s22 = sadd.s32 1, %s18
    $region7: #{tpu_custom_call.1} parent=1 // loop_footer_branch
      %17 = sbr.rel target = $region3
    $region8: #{tpu_custom_call.1} parent=1 // loop_exit
      _
    %742 = vsyncpa [#allocation3], 1
    %s743 = scalar_lea.sflag [#allocation3], 1
    %744 = vsyncpa %s743, 1
    %745 = vsyncpa [#allocation6], 1
    %746 = vsyncpa [#allocation4], 1
    %s747 = scalar_lea.sflag [#allocation4], 1
    %748 = vsyncpa %s747, 1

</llo_original>
